<compile_context>
chip_gen: v6e
topology: v6e:2x2x1
jax: 0.10.0
libtpu: 0.0.40
codegen_flags: <defaults>
</compile_context>

<pallas_src>
import functools
import math

import jax
import jax.numpy as jnp
from jax.experimental import pallas as pl
from jax.experimental.pallas import tpu as pltpu


def _tile(dim, target, quantum=1):
    """Largest divisor of `dim` that is <= target and a multiple of `quantum`; else full dim."""
    t = min(dim, target)
    t -= t % quantum
    while t >= quantum:
        if dim % t == 0:
            return t
        t -= quantum
    return dim


def _softmax_exp_dtype():
    """bf16 exp on v6e/v7x (bf16 EUP); keep f32 on v5e (no bf16 EUP)."""
    try:
        kind = jax.devices()[0].device_kind.lower()
    except Exception:
        return jnp.float32
    return jnp.float32 if "v5" in kind else jnp.bfloat16


# ---------------------------------------------------------------------------
# Dense: y = act(x @ w + b), tiled over (M, N, K) with f32 accumulator scratch
# ---------------------------------------------------------------------------

def _dense_kernel(x_ref, w_ref, b_ref, o_ref, acc_ref, *, activation):
    @pl.when(pl.program_id(2) == 0)
    def _():
        acc_ref[...] = jnp.zeros_like(acc_ref)

    acc_ref[...] += jnp.dot(x_ref[...], w_ref[...],
                            preferred_element_type=jnp.float32)

    @pl.when(pl.program_id(2) == pl.num_programs(2) - 1)
    def _():
        y = acc_ref[...] + b_ref[...]
        if activation == "gelu":
            # TODO(synk): HF BERT uses the exact erf-GELU; tanh approximation used here.
            y = 0.5 * y * (1.0 + jnp.tanh(0.7978845608028654 *
                                          (y + 0.044715 * y * y * y)))
        elif activation == "tanh":
            y = jnp.tanh(y)
        o_ref[...] = y.astype(o_ref.dtype)


def dense(x, w, b, activation=None, out_dtype=jnp.bfloat16,
          tile_m=512, tile_n=512, tile_k=1024):
    M, K = x.shape
    K2, N = w.shape
    assert K == K2
    tm = _tile(M, tile_m, 8)
    tn = _tile(N, tile_n, 128)
    tk = _tile(K, tile_k, 128)
    return pl.pallas_call(
        functools.partial(_dense_kernel, activation=activation),
        out_shape=jax.ShapeDtypeStruct((M, N), out_dtype),
        grid=(M // tm, N // tn, K // tk),            # reduction axis last
        in_specs=[
            pl.BlockSpec((tm, tk), lambda i, j, k: (i, k)),
            pl.BlockSpec((tk, tn), lambda i, j, k: (k, j)),
            pl.BlockSpec((1, tn), lambda i, j, k: (0, j)),
        ],
        out_specs=pl.BlockSpec((tm, tn), lambda i, j, k: (i, j)),
        scratch_shapes=[pltpu.VMEM((tm, tn), jnp.float32)],
        compiler_params=pltpu.CompilerParams(
            dimension_semantics=("parallel", "parallel", "arbitrary")),
    )(x, w, b.reshape(1, N).astype(jnp.float32))


# ---------------------------------------------------------------------------
# Fused dense + residual-add + LayerNorm (epilogue on the last K step).
# tile_n = full N (= H) so the whole row is resident for the LN statistics.
# ---------------------------------------------------------------------------

def _dense_res_ln_kernel(x_ref, w_ref, b_ref, r_ref, g_ref, bb_ref, o_ref,
                         acc_ref, *, eps):
    @pl.when(pl.program_id(1) == 0)
    def _():
        acc_ref[...] = jnp.zeros_like(acc_ref)

    acc_ref[...] += jnp.dot(x_ref[...], w_ref[...],
                            preferred_element_type=jnp.float32)

    @pl.when(pl.program_id(1) == pl.num_programs(1) - 1)
    def _():
        y = acc_ref[...] + b_ref[...] + r_ref[...].astype(jnp.float32)
        mean = jnp.mean(y, axis=-1, keepdims=True)
        yc = y - mean
        var = jnp.mean(yc * yc, axis=-1, keepdims=True)
        inv = jax.lax.rsqrt(var + eps)
        o_ref[...] = ((yc * inv) * g_ref[...] + bb_ref[...]).astype(o_ref.dtype)


def dense_residual_layernorm(x, w, b, residual, gamma, beta, eps=1e-12,
                             out_dtype=jnp.bfloat16, tile_m=512, tile_k=1024):
    M, K = x.shape
    K2, N = w.shape
    assert K == K2 and residual.shape == (M, N)
    tm = _tile(M, tile_m, 8)
    tk = _tile(K, tile_k, 128)
    return pl.pallas_call(
        functools.partial(_dense_res_ln_kernel, eps=eps),
        out_shape=jax.ShapeDtypeStruct((M, N), out_dtype),
        grid=(M // tm, K // tk),                      # reduction axis last
        in_specs=[
            pl.BlockSpec((tm, tk), lambda i, k: (i, k)),
            pl.BlockSpec((tk, N), lambda i, k: (k, 0)),
            pl.BlockSpec((1, N), lambda i, k: (0, 0)),
            pl.BlockSpec((tm, N), lambda i, k: (i, 0)),   # residual (constant over k -> no re-DMA)
            pl.BlockSpec((1, N), lambda i, k: (0, 0)),
            pl.BlockSpec((1, N), lambda i, k: (0, 0)),
        ],
        out_specs=pl.BlockSpec((tm, N), lambda i, k: (i, 0)),
        scratch_shapes=[pltpu.VMEM((tm, N), jnp.float32)],
        compiler_params=pltpu.CompilerParams(
            dimension_semantics=("parallel", "arbitrary")),
    )(x, w, b.reshape(1, N).astype(jnp.float32), residual,
      gamma.reshape(1, N).astype(jnp.float32),
      beta.reshape(1, N).astype(jnp.float32))


# ---------------------------------------------------------------------------
# Standalone LayerNorm (embeddings only), row-tiled, f32 statistics
# ---------------------------------------------------------------------------

def _ln_kernel(x_ref, g_ref, b_ref, o_ref, *, eps):
    x = x_ref[...].astype(jnp.float32)
    mean = jnp.mean(x, axis=-1, keepdims=True)
    xc = x - mean
    var = jnp.mean(xc * xc, axis=-1, keepdims=True)
    inv = jax.lax.rsqrt(var + eps)
    o_ref[...] = ((xc * inv) * g_ref[...] + b_ref[...]).astype(o_ref.dtype)


def layer_norm(x, gamma, beta, eps=1e-12, out_dtype=jnp.bfloat16, tile_m=512):
    M, H = x.shape
    tm = _tile(M, tile_m, 8)
    row_spec = pl.BlockSpec((tm, H), lambda i: (i, 0))
    vec_spec = pl.BlockSpec((1, H), lambda i: (0, 0))
    return pl.pallas_call(
        functools.partial(_ln_kernel, eps=eps),
        out_shape=jax.ShapeDtypeStruct((M, H), out_dtype),
        grid=(M // tm,),
        in_specs=[row_spec, vec_spec, vec_spec],
        out_specs=row_spec,
        compiler_params=pltpu.CompilerParams(dimension_semantics=("parallel",)),
    )(x, gamma.reshape(1, H).astype(jnp.float32),
      beta.reshape(1, H).astype(jnp.float32))


# ---------------------------------------------------------------------------
# Attention: grid over (batch, query tile); all heads per step; reads fused QKV.
# The 1/sqrt(DH) scale is pre-folded into the Q columns of w_qkv (see init).
# ---------------------------------------------------------------------------

def _attn_kernel(q_ref, k_ref, v_ref, m_ref, o_ref, *, num_heads, exp_dtype):
    _, H = q_ref.shape
    DH = H // num_heads
    k = k_ref[...]
    v = v_ref[...]
    # Additive mask from the [1,S] padding row: 0 for valid, -1e4 for pad.
    mask_bias = (m_ref[...].astype(jnp.float32) - 1.0) * 10000.0          # [1, S]

    # TODO(synk): for 12-head (DH=64) BERT, move heads onto a grid axis (2 heads/block)
    # to keep 128-lane alignment and bound live ranges; static unroll kept for small heads.
    ctx_heads = []
    for h in range(num_heads):                     # static unroll over heads
        lo = h * DH
        # q @ k^T via dot_general contracting on last axes (no materialized transpose)
        s = jax.lax.dot_general(
            q_ref[:, lo:lo + DH], k[:, lo:lo + DH],
            dimension_numbers=(((1,), (1,)), ((), ())),
            preferred_element_type=jnp.float32)                           # [tq, S]
        # single elementwise pass over [tq,S]: bias already has -rowmax folded in
        row_max = jnp.max(s, axis=-1, keepdims=True)                      # [tq, 1]
        p = jnp.exp((s + (mask_bias - row_max)).astype(exp_dtype))
        denom = jnp.sum(p.astype(jnp.float32), axis=-1, keepdims=True)
        ctx = jnp.dot(p.astype(v.dtype), v[:, lo:lo + DH],
                      preferred_element_type=jnp.float32)                 # [tq, DH]
        ctx_heads.append(ctx * pl.reciprocal(denom, approx=True))

    # single lane-dense full-width store (avoids masked partial stores per head)
    o_ref[...] = jnp.concatenate(ctx_heads, axis=-1).astype(o_ref.dtype)


def attention(qkv, padding_mask_f32, num_heads, tile_q=256):
    """qkv: [B, S, 3H] bf16 (fused projection, Q pre-scaled); padding_mask_f32: [B, 1, S]."""
    B, S, H3 = qkv.shape
    H = H3 // 3
    tq = _tile(S, tile_q, 8)
    exp_dtype = _softmax_exp_dtype()
    return pl.pallas_call(
        functools.partial(_attn_kernel, num_heads=num_heads, exp_dtype=exp_dtype),
        out_shape=jax.ShapeDtypeStruct((B, S, H), jnp.bfloat16),
        grid=(B, S // tq),
        in_specs=[
            pl.BlockSpec((None, tq, H), lambda b, qi: (b, qi, 0)),   # Q tile
            pl.BlockSpec((None, S, H), lambda b, qi: (b, 0, 1)),     # K (all rows)
            pl.BlockSpec((None, S, H), lambda b, qi: (b, 0, 2)),     # V (all rows)
            pl.BlockSpec((None, 1, S), lambda b, qi: (b, 0, 0)),     # padding mask row
        ],
        out_specs=pl.BlockSpec((None, tq, H), lambda b, qi: (b, qi, 0)),
        compiler_params=pltpu.CompilerParams(
            dimension_semantics=("parallel", "parallel")),
    )(qkv, qkv, qkv, padding_mask_f32)


# ---------------------------------------------------------------------------
# Parameters (deterministic synthetic init — shapes match BertModel).
# Matmul weights stored in bf16; embeddings / biases / LN params in f32.
# The attention scale 1/sqrt(DH) is folded into the Q columns of w_qkv/b_qkv here
# (apply the same one-time transform when importing a real checkpoint).
# ---------------------------------------------------------------------------

def init_bert_params(key, vocab_size, max_pos, type_vocab, H, I, L, num_heads):
    assert H % num_heads == 0
    std = 0.02
    scale = 1.0 / math.sqrt(H // num_heads)
    keys = iter(jax.random.split(key, 8 + 8 * L))

    def norm_f32(shape):
        return jax.random.normal(next(keys), shape, jnp.float32) * std

    params = {
        "word_emb": norm_f32((vocab_size, H)),
        "pos_emb": norm_f32((max_pos, H)),
        "type_emb": norm_f32((type_vocab, H)),
        "emb_ln_g": jnp.ones((H,), jnp.float32),
        "emb_ln_b": jnp.zeros((H,), jnp.float32),
        "pooler_w": norm_f32((H, H)).astype(jnp.bfloat16),
        "pooler_b": jnp.zeros((H,), jnp.float32),
        "layers": [],
    }
    for _ in range(L):
        w_qkv = norm_f32((H, 3 * H))
        w_qkv = w_qkv.at[:, :H].multiply(scale)          # fold 1/sqrt(DH) into Q columns
        b_qkv = jnp.zeros((3 * H,), jnp.float32)         # (scale b_qkv[:H] too if nonzero)
        params["layers"].append({
            "w_qkv": w_qkv.astype(jnp.bfloat16), "b_qkv": b_qkv,
            "wo": norm_f32((H, H)).astype(jnp.bfloat16), "bo": jnp.zeros((H,), jnp.float32),
            "ln1_g": jnp.ones((H,), jnp.float32), "ln1_b": jnp.zeros((H,), jnp.float32),
            "wi": norm_f32((H, I)).astype(jnp.bfloat16), "bi": jnp.zeros((I,), jnp.float32),
            "wf": norm_f32((I, H)).astype(jnp.bfloat16), "bf": jnp.zeros((H,), jnp.float32),
            "ln2_g": jnp.ones((H,), jnp.float32), "ln2_b": jnp.zeros((H,), jnp.float32),
        })
    return params


# ---------------------------------------------------------------------------
# Forward pass: Bert.forward(input_ids, segment_ids, padding_mask)
#               -> (sequence_output [B,S,H] f32, pooled_output [B,H] f32)
# ---------------------------------------------------------------------------

def bert_forward(params, input_ids, segment_ids, padding_mask, num_heads):
    B, S = input_ids.shape
    H = params["word_emb"].shape[1]
    L = len(params["layers"])

    # --- embeddings (table gathers are plain-JAX glue) ---
    pos_ids = jnp.arange(S, dtype=jnp.int32)[None, :]
    emb = (jnp.take(params["word_emb"], input_ids, axis=0)
           + jnp.take(params["pos_emb"], pos_ids, axis=0)
           + jnp.take(params["type_emb"], segment_ids, axis=0))
    x = layer_norm(emb.reshape(B * S, H), params["emb_ln_g"], params["emb_ln_b"])

    mask_f32 = padding_mask.astype(jnp.float32).reshape(B, 1, S)

    for li, lp in enumerate(params["layers"]):
        last = li == L - 1
        # self-attention (fused QKV projection; heads sliced in-kernel, no transposes)
        qkv = dense(x, lp["w_qkv"], lp["b_qkv"])                        # [B*S, 3H]
        ctx = attention(qkv.reshape(B, S, 3 * H), mask_f32, num_heads)  # [B, S, H]
        # attn-out dense with fused residual-add + LayerNorm epilogue
        x = dense_residual_layernorm(ctx.reshape(B * S, H), lp["wo"], lp["bo"],
                                     residual=x, gamma=lp["ln1_g"], beta=lp["ln1_b"])
        # feed-forward; FFN-out dense with fused residual-add + LayerNorm epilogue
        inter = dense(x, lp["wi"], lp["bi"], activation="gelu")
        x = dense_residual_layernorm(inter, lp["wf"], lp["bf"],
                                     residual=x, gamma=lp["ln2_g"], beta=lp["ln2_b"],
                                     out_dtype=jnp.float32 if last else jnp.bfloat16)

    sequence_output = x.reshape(B, S, H)                      # already f32 from fused LN
    cls_tok = sequence_output[:, 0, :].astype(jnp.bfloat16)
    pooled_output = dense(cls_tok, params["pooler_w"], params["pooler_b"],
                          activation="tanh", out_dtype=jnp.float32)
    return sequence_output, pooled_output


# ---------------------------------------------------------------------------

if __name__ == "__main__":
    B, S = 2, 128
    H, NUM_HEADS, INTERMEDIATE, LAYERS = 256, 2, 512, 2
    VOCAB, MAX_POS, TYPE_VOCAB = 128, 128, 2

    key = jax.random.PRNGKey(0)
    k_params, k_ids = jax.random.split(key)
    params = init_bert_params(k_params, VOCAB, MAX_POS, TYPE_VOCAB,
                              H, INTERMEDIATE, LAYERS, NUM_HEADS)

    input_ids = jax.random.randint(k_ids, (B, S), 0, VOCAB, dtype=jnp.int32)
    segment_ids = jnp.concatenate(
        [jnp.zeros((B, S // 2), jnp.int32), jnp.ones((B, S // 2), jnp.int32)], axis=1)
    padding_mask = jnp.ones((B, S), jnp.int32).at[:, -16:].set(0)

    seq_out, pooled = bert_forward(params, input_ids, segment_ids, padding_mask, NUM_HEADS)
    jax.block_until_ready((seq_out, pooled))

    assert seq_out.shape == (B, S, H) and pooled.shape == (B, H)
    assert seq_out.dtype == jnp.float32 and pooled.dtype == jnp.float32
    assert bool(jnp.all(jnp.isfinite(seq_out))) and bool(jnp.all(jnp.isfinite(pooled)))
    print("KERNEL_OK")
</pallas_src>

<mosaic_0001>
module attributes {stable_mosaic.version = 11 : i64} {
  func.func @_ln_kernel(%arg0: i32, %arg1: memref<256x256xf32, #tpu.memory_space<vmem>>, %arg2: memref<1x256xf32, #tpu.memory_space<vmem>>, %arg3: memref<1x256xf32, #tpu.memory_space<vmem>>, %arg4: memref<256x256xbf16, #tpu.memory_space<vmem>>) attributes {dimension_semantics = [#tpu.dimension_semantics<parallel>], iteration_bounds = array<i64: 1>, scalar_prefetch = 0 : i64, scratch_operands = 0 : i64, tpu.core_type = #tpu.core_type<tc>, window_params = [{transform_indices = @transform_0, window_bounds = array<i64: 256, 256>}, {pipeline_mode = #tpu.pipeline_mode<synchronous>, transform_indices = @transform_1, window_bounds = array<i64: 1, 256>}, {pipeline_mode = #tpu.pipeline_mode<synchronous>, transform_indices = @transform_2, window_bounds = array<i64: 1, 256>}, {transform_indices = @transform_3, window_bounds = array<i64: 256, 256>}]} {
    %c0 = arith.constant 0 : index
    %c0_0 = arith.constant 0 : index
    %0 = vector.load %arg1[%c0, %c0_0] : memref<256x256xf32, #tpu.memory_space<vmem>>, vector<256x256xf32>
    %cst = arith.constant dense<0.000000e+00> : vector<256xf32>
    %1 = vector.multi_reduction <add>, %0, %cst [1] : vector<256x256xf32> to vector<256xf32>
    %2 = vector.shape_cast %1 : vector<256xf32> to vector<256x1xf32>
    %cst_1 = arith.constant 2.560000e+02 : f32
    %3 = vector.broadcast %cst_1 : f32 to vector<256x1xf32>
    %4 = arith.divf %2, %3 : vector<256x1xf32>
    %5 = vector.broadcast %4 : vector<256x1xf32> to vector<256x256xf32>
    %6 = arith.subf %0, %5 : vector<256x256xf32>
    %7 = arith.mulf %6, %6 : vector<256x256xf32>
    %cst_2 = arith.constant dense<0.000000e+00> : vector<256xf32>
    %8 = vector.multi_reduction <add>, %7, %cst_2 [1] : vector<256x256xf32> to vector<256xf32>
    %9 = vector.shape_cast %8 : vector<256xf32> to vector<256x1xf32>
    %cst_3 = arith.constant 2.560000e+02 : f32
    %10 = vector.broadcast %cst_3 : f32 to vector<256x1xf32>
    %11 = arith.divf %9, %10 : vector<256x1xf32>
    %cst_4 = arith.constant 9.99999996E-13 : f32
    %12 = vector.broadcast %cst_4 : f32 to vector<256x1xf32>
    %13 = arith.addf %11, %12 : vector<256x1xf32>
    %14 = math.rsqrt %13 : vector<256x1xf32>
    %15 = vector.broadcast %14 : vector<256x1xf32> to vector<256x256xf32>
    %16 = arith.mulf %6, %15 : vector<256x256xf32>
    %c0_5 = arith.constant 0 : index
    %c0_6 = arith.constant 0 : index
    %17 = vector.load %arg2[%c0_5, %c0_6] : memref<1x256xf32, #tpu.memory_space<vmem>>, vector<1x256xf32>
    %18 = vector.broadcast %17 : vector<1x256xf32> to vector<256x256xf32>
    %19 = arith.mulf %16, %18 : vector<256x256xf32>
    %c0_7 = arith.constant 0 : index
    %c0_8 = arith.constant 0 : index
    %20 = vector.load %arg3[%c0_7, %c0_8] : memref<1x256xf32, #tpu.memory_space<vmem>>, vector<1x256xf32>
    %21 = vector.broadcast %20 : vector<1x256xf32> to vector<256x256xf32>
    %22 = arith.addf %19, %21 : vector<256x256xf32>
    %23 = arith.truncf %22 : vector<256x256xf32> to vector<256x256xbf16>
    %c0_9 = arith.constant 0 : index
    %c0_10 = arith.constant 0 : index
    %24 = vector.load %arg4[%c0_9, %c0_10] : memref<256x256xbf16, #tpu.memory_space<vmem>>, vector<256x256xbf16>
    tpu.vector_store %arg4[%c0_9, %c0_10], %23 {strides = array<i32>} : memref<256x256xbf16, #tpu.memory_space<vmem>>, vector<256x256xbf16>,
    return
  }
  func.func @transform_0(%arg0: i32) -> (i32, i32) {
    %c0_i32 = arith.constant 0 : i32
    %c0_i32_0 = arith.constant 0 : i32
    return %arg0, %c0_i32 : i32, i32
  }
  func.func @transform_1(%arg0: i32) -> (i32, i32) {
    %c0_i32 = arith.constant 0 : i32
    %c0_i32_0 = arith.constant 0 : i32
    %c0_i32_1 = arith.constant 0 : i32
    return %c0_i32, %c0_i32_0 : i32, i32
  }
  func.func @transform_2(%arg0: i32) -> (i32, i32) {
    %c0_i32 = arith.constant 0 : i32
    %c0_i32_0 = arith.constant 0 : i32
    %c0_i32_1 = arith.constant 0 : i32
    return %c0_i32, %c0_i32_0 : i32, i32
  }
  func.func @transform_3(%arg0: i32) -> (i32, i32) {
    %c0_i32 = arith.constant 0 : i32
    %c0_i32_0 = arith.constant 0 : i32
    return %arg0, %c0_i32 : i32, i32
  }
}

</mosaic_0001>

<llo_original>
// kernel: tpu_custom_call.1
$region0: #{tpu_custom_call.1}
  #allocation0 [shape = 'u32[]', space=smem, size = 0x4, offset = 0x4, fixed_abs, tag = 'smem constant byte address 0x4 - core index']
  #allocation1 [shape = 'u32[144,128]{1,0:T(1,128)}', space=vmem, size = 0x12000, scoped, tag = 'internal scratch']
  %s0 = inlined_call_operand.hbm [shape: f32[256,256], index: 0, kind: input, shape index: {}]
  %s1 = inlined_call_operand.hbm [shape: f32[1,256], index: 1, kind: input, shape index: {}]
  %s2 = inlined_call_operand.vmem [shape: f32[1,256], index: 2, kind: input, shape index: {}]
  %s3 = inlined_call_operand.hbm [shape: bf16[256,256], index: 3, kind: output, shape index: {}]
  %s4 = sld [smem:[#allocation0]]
  $region30: #{tpu_custom_call.1} parent=0
    _
  %s6 = ssub.s32 1, %s4
  %s7 = scalar_select 0, %s6, %s4
  $region1: #{tpu_custom_call.1} parent=0
    #allocation2 [shape = 'u8[262144]{0}', space=vmem, size = 0x40000, scoped, tag = 'input window, operand 0, single buffered']
    #allocation3 [shape = 's32[1]{0}', space=sflag, size = 0x4, scoped, tag = 'scoped memory for tpu_custom_call.1']
    #allocation4 [shape = 's32[1]{0}', space=sflag, size = 0x4, scoped, tag = 'scoped memory for tpu_custom_call.1']
    #allocation5 [shape = 'u8[1024]{0}', space=vmem, size = 0x400, scoped, tag = 'input window, operand 1, single buffered']
    #allocation6 [shape = 's32[1]{0}', space=sflag, size = 0x4, scoped, tag = 'scoped memory for tpu_custom_call.1']
    #allocation7 [shape = 'u8[131072]{0}', space=vmem, size = 0x20000, scoped, tag = 'output window, operand 0, single buffered']
    %8 = vsyncpa [#allocation3], 0
    %9 = vsyncpa [#allocation6], 0
    %10 = vsyncpa [#allocation4], 0
    // Predicated region
    $region2: #{tpu_custom_call.1} parent=1 // pred_check
      _
    $region3: #{tpu_custom_call.1} parent=1 // pred_check_branch
      %12 = sbr.rel (0) target = $region5
    $region4: #{tpu_custom_call.1} parent=1 // pred_region
      %s14 = ssub.s32 8192, 8192
      %15 = vsyncadd [#allocation3], %s14
      %s16 = sshll.u32 [#allocation2], 4
      %s17 = int_to_ptr.vmem [resolvable:$true] %s16
      %22 = dma.hbm_to_vmem [thread:$0]  %s0, 8192, %s17, [#allocation3], 256, 256, 16
    $region5: #{tpu_custom_call.1} parent=1 // pred_fallthru
      _
    // Predicated region
    $region6: #{tpu_custom_call.1} parent=1 // pred_check
      _
    $region7: #{tpu_custom_call.1} parent=1 // pred_check_branch
      %24 = sbr.rel (0) target = $region9
    $region8: #{tpu_custom_call.1} parent=1 // pred_region
      %s26 = ssub.s32 32, 32
      %27 = vsyncadd [#allocation6], %s26
      %s29 = sshll.u32 [#allocation5], 4
      %s30 = int_to_ptr.vmem [resolvable:$true] %s29
      %32 = dma.hbm_to_vmem [thread:$0]  %s1, 32, %s30, [#allocation6]
    $region9: #{tpu_custom_call.1} parent=1 // pred_fallthru
      _
    // Predicated region
    $region10: #{tpu_custom_call.1} parent=1 // pred_check
      _
    $region11: #{tpu_custom_call.1} parent=1 // pred_check_branch
      %34 = sbr.rel (0) target = $region13
    $region12: #{tpu_custom_call.1} parent=1 // pred_region
      _
    $region13: #{tpu_custom_call.1} parent=1 // pred_fallthru
      _
    // Predicated region
    $region14: #{tpu_custom_call.1} parent=1 // pred_check
      _
    $region15: #{tpu_custom_call.1} parent=1 // pred_check_branch
      %36 = sbr.rel (0) target = $region17
    $region16: #{tpu_custom_call.1} parent=1 // pred_region
      %37 = dma.done [#allocation3], 8192
    $region17: #{tpu_custom_call.1} parent=1 // pred_fallthru
      _
    // Predicated region
    $region18: #{tpu_custom_call.1} parent=1 // pred_check
      _
    $region19: #{tpu_custom_call.1} parent=1 // pred_check_branch
      %39 = sbr.rel (0) target = $region21
    $region20: #{tpu_custom_call.1} parent=1 // pred_region
      %40 = dma.done [#allocation6], 32
    $region21: #{tpu_custom_call.1} parent=1 // pred_fallthru
      _
    %v41 = vld [vmem:[#allocation2] sm:$0xff]
    %v42 = vld [vmem:[#allocation2 + $0x8] sm:$0xff]
    %v43 = vld [vmem:[#allocation2 + $0x10] sm:$0xff]
    %v44 = vld [vmem:[#allocation2 + $0x18] sm:$0xff]
    %v45 = vld [vmem:[#allocation2 + $0x20] sm:$0xff]
    %v46 = vld [vmem:[#allocation2 + $0x28] sm:$0xff]
    %v47 = vld [vmem:[#allocation2 + $0x30] sm:$0xff]
    %v48 = vld [vmem:[#allocation2 + $0x38] sm:$0xff]
    %v49 = vld [vmem:[#allocation2 + $0x40] sm:$0xff]
    %v50 = vld [vmem:[#allocation2 + $0x48] sm:$0xff]
    %v51 = vld [vmem:[#allocation2 + $0x50] sm:$0xff]
    %v52 = vld [vmem:[#allocation2 + $0x58] sm:$0xff]
    %v53 = vld [vmem:[#allocation2 + $0x60] sm:$0xff]
    %v54 = vld [vmem:[#allocation2 + $0x68] sm:$0xff]
    %v55 = vld [vmem:[#allocation2 + $0x70] sm:$0xff]
    %v56 = vld [vmem:[#allocation2 + $0x78] sm:$0xff]
    %v57 = vld [vmem:[#allocation2 + $0x80] sm:$0xff]
    %v58 = vld [vmem:[#allocation2 + $0x88] sm:$0xff]
    %v59 = vld [vmem:[#allocation2 + $0x90] sm:$0xff]
    %v60 = vld [vmem:[#allocation2 + $0x98] sm:$0xff]
    %v61 = vld [vmem:[#allocation2 + $0xa0] sm:$0xff]
    %v62 = vld [vmem:[#allocation2 + $0xa8] sm:$0xff]
    %v63 = vld [vmem:[#allocation2 + $0xb0] sm:$0xff]
    %v64 = vld [vmem:[#allocation2 + $0xb8] sm:$0xff]
    %v65 = vld [vmem:[#allocation2 + $0xc0] sm:$0xff]
    %v66 = vld [vmem:[#allocation2 + $0xc8] sm:$0xff]
    %v67 = vld [vmem:[#allocation2 + $0xd0] sm:$0xff]
    %v68 = vld [vmem:[#allocation2 + $0xd8] sm:$0xff]
    %v69 = vld [vmem:[#allocation2 + $0xe0] sm:$0xff]
    %v70 = vld [vmem:[#allocation2 + $0xe8] sm:$0xff]
    %v71 = vld [vmem:[#allocation2 + $0xf0] sm:$0xff]
    %v72 = vld [vmem:[#allocation2 + $0xf8] sm:$0xff]
    %v73 = vld [vmem:[#allocation2 + $0x100] sm:$0xff]
    %v74 = vld [vmem:[#allocation2 + $0x108] sm:$0xff]
    %v75 = vld [vmem:[#allocation2 + $0x110] sm:$0xff]
    %v76 = vld [vmem:[#allocation2 + $0x118] sm:$0xff]
    %v77 = vld [vmem:[#allocation2 + $0x120] sm:$0xff]
    %v78 = vld [vmem:[#allocation2 + $0x128] sm:$0xff]
    %v79 = vld [vmem:[#allocation2 + $0x130] sm:$0xff]
    %v80 = vld [vmem:[#allocation2 + $0x138] sm:$0xff]
    %v81 = vld [vmem:[#allocation2 + $0x140] sm:$0xff]
    %v82 = vld [vmem:[#allocation2 + $0x148] sm:$0xff]
    %v83 = vld [vmem:[#allocation2 + $0x150] sm:$0xff]
    %v84 = vld [vmem:[#allocation2 + $0x158] sm:$0xff]
    %v85 = vld [vmem:[#allocation2 + $0x160] sm:$0xff]
    %v86 = vld [vmem:[#allocation2 + $0x168] sm:$0xff]
    %v87 = vld [vmem:[#allocation2 + $0x170] sm:$0xff]
    %v88 = vld [vmem:[#allocation2 + $0x178] sm:$0xff]
    %v89 = vld [vmem:[#allocation2 + $0x180] sm:$0xff]
    %v90 = vld [vmem:[#allocation2 + $0x188] sm:$0xff]
    %v91 = vld [vmem:[#allocation2 + $0x190] sm:$0xff]
    %v92 = vld [vmem:[#allocation2 + $0x198] sm:$0xff]
    %v93 = vld [vmem:[#allocation2 + $0x1a0] sm:$0xff]
    %v94 = vld [vmem:[#allocation2 + $0x1a8] sm:$0xff]
    %v95 = vld [vmem:[#allocation2 + $0x1b0] sm:$0xff]
    %v96 = vld [vmem:[#allocation2 + $0x1b8] sm:$0xff]
    %v97 = vld [vmem:[#allocation2 + $0x1c0] sm:$0xff]
    %v98 = vld [vmem:[#allocation2 + $0x1c8] sm:$0xff]
    %v99 = vld [vmem:[#allocation2 + $0x1d0] sm:$0xff]
    %v100 = vld [vmem:[#allocation2 + $0x1d8] sm:$0xff]
    %v101 = vld [vmem:[#allocation2 + $0x1e0] sm:$0xff]
    %v102 = vld [vmem:[#allocation2 + $0x1e8] sm:$0xff]
    %v103 = vld [vmem:[#allocation2 + $0x1f0] sm:$0xff]
    %v104 = vld [vmem:[#allocation2 + $0x1f8] sm:$0xff]
    %v105 = vadd.f32 %v41, %v42
    %106 = vadd.xlane.f32.xlu0 %v105
    %v107 = vpop.xlane.xlu0 %106
    %v108 = vadd.f32 %v43, %v44
    %109 = vadd.xlane.f32.xlu0 %v108
    %v110 = vpop.xlane.xlu0 %109
    %v111 = vadd.f32 %v45, %v46
    %112 = vadd.xlane.f32.xlu0 %v111
    %v113 = vpop.xlane.xlu0 %112
    %v114 = vadd.f32 %v47, %v48
    %115 = vadd.xlane.f32.xlu0 %v114
    %v116 = vpop.xlane.xlu0 %115
    %v117 = vadd.f32 %v49, %v50
    %118 = vadd.xlane.f32.xlu0 %v117
    %v119 = vpop.xlane.xlu0 %118
    %v120 = vadd.f32 %v51, %v52
    %121 = vadd.xlane.f32.xlu0 %v120
    %v122 = vpop.xlane.xlu0 %121
    %v123 = vadd.f32 %v53, %v54
    %124 = vadd.xlane.f32.xlu0 %v123
    %v125 = vpop.xlane.xlu0 %124
    %v126 = vadd.f32 %v55, %v56
    %127 = vadd.xlane.f32.xlu0 %v126
    %v128 = vpop.xlane.xlu0 %127
    %v129 = vadd.f32 %v57, %v58
    %130 = vadd.xlane.f32.xlu0 %v129
    %v131 = vpop.xlane.xlu0 %130
    %v132 = vadd.f32 %v59, %v60
    %133 = vadd.xlane.f32.xlu0 %v132
    %v134 = vpop.xlane.xlu0 %133
    %v135 = vadd.f32 %v61, %v62
    %136 = vadd.xlane.f32.xlu0 %v135
    %v137 = vpop.xlane.xlu0 %136
    %v138 = vadd.f32 %v63, %v64
    %139 = vadd.xlane.f32.xlu0 %v138
    %v140 = vpop.xlane.xlu0 %139
    %v141 = vadd.f32 %v65, %v66
    %142 = vadd.xlane.f32.xlu0 %v141
    %v143 = vpop.xlane.xlu0 %142
    %v144 = vadd.f32 %v67, %v68
    %145 = vadd.xlane.f32.xlu0 %v144
    %v146 = vpop.xlane.xlu0 %145
    %v147 = vadd.f32 %v69, %v70
    %148 = vadd.xlane.f32.xlu0 %v147
    %v149 = vpop.xlane.xlu0 %148
    %v150 = vadd.f32 %v71, %v72
    %151 = vadd.xlane.f32.xlu0 %v150
    %v152 = vpop.xlane.xlu0 %151
    %v153 = vadd.f32 %v73, %v74
    %154 = vadd.xlane.f32.xlu0 %v153
    %v155 = vpop.xlane.xlu0 %154
    %v156 = vadd.f32 %v75, %v76
    %157 = vadd.xlane.f32.xlu0 %v156
    %v158 = vpop.xlane.xlu0 %157
    %v159 = vadd.f32 %v77, %v78
    %160 = vadd.xlane.f32.xlu0 %v159
    %v161 = vpop.xlane.xlu0 %160
    %v162 = vadd.f32 %v79, %v80
    %163 = vadd.xlane.f32.xlu0 %v162
    %v164 = vpop.xlane.xlu0 %163
    %v165 = vadd.f32 %v81, %v82
    %166 = vadd.xlane.f32.xlu0 %v165
    %v167 = vpop.xlane.xlu0 %166
    %v168 = vadd.f32 %v83, %v84
    %169 = vadd.xlane.f32.xlu0 %v168
    %v170 = vpop.xlane.xlu0 %169
    %v171 = vadd.f32 %v85, %v86
    %172 = vadd.xlane.f32.xlu0 %v171
    %v173 = vpop.xlane.xlu0 %172
    %v174 = vadd.f32 %v87, %v88
    %175 = vadd.xlane.f32.xlu0 %v174
    %v176 = vpop.xlane.xlu0 %175
    %v177 = vadd.f32 %v89, %v90
    %178 = vadd.xlane.f32.xlu0 %v177
    %v179 = vpop.xlane.xlu0 %178
    %v180 = vadd.f32 %v91, %v92
    %181 = vadd.xlane.f32.xlu0 %v180
    %v182 = vpop.xlane.xlu0 %181
    %v183 = vadd.f32 %v93, %v94
    %184 = vadd.xlane.f32.xlu0 %v183
    %v185 = vpop.xlane.xlu0 %184
    %v186 = vadd.f32 %v95, %v96
    %187 = vadd.xlane.f32.xlu0 %v186
    %v188 = vpop.xlane.xlu0 %187
    %v189 = vadd.f32 %v97, %v98
    %190 = vadd.xlane.f32.xlu0 %v189
    %v191 = vpop.xlane.xlu0 %190
    %v192 = vadd.f32 %v99, %v100
    %193 = vadd.xlane.f32.xlu0 %v192
    %v194 = vpop.xlane.xlu0 %193
    %v195 = vadd.f32 %v101, %v102
    %196 = vadd.xlane.f32.xlu0 %v195
    %v197 = vpop.xlane.xlu0 %196
    %v198 = vadd.f32 %v103, %v104
    %199 = vadd.xlane.f32.xlu0 %v198
    %v200 = vpop.xlane.xlu0 %199
    %v201 = vrcp.pop 256.0
    %v202 = vmul.f32 %v107, %v201
    %v203 = vmul.f32 %v110, %v201
    %v204 = vmul.f32 %v113, %v201
    %v205 = vmul.f32 %v116, %v201
    %v206 = vmul.f32 %v119, %v201
    %v207 = vmul.f32 %v122, %v201
    %v208 = vmul.f32 %v125, %v201
    %v209 = vmul.f32 %v128, %v201
    %v210 = vmul.f32 %v131, %v201
    %v211 = vmul.f32 %v134, %v201
    %v212 = vmul.f32 %v137, %v201
    %v213 = vmul.f32 %v140, %v201
    %v214 = vmul.f32 %v143, %v201
    %v215 = vmul.f32 %v146, %v201
    %v216 = vmul.f32 %v149, %v201
    %v217 = vmul.f32 %v152, %v201
    %v218 = vmul.f32 %v155, %v201
    %v219 = vmul.f32 %v158, %v201
    %v220 = vmul.f32 %v161, %v201
    %v221 = vmul.f32 %v164, %v201
    %v222 = vmul.f32 %v167, %v201
    %v223 = vmul.f32 %v170, %v201
    %v224 = vmul.f32 %v173, %v201
    %v225 = vmul.f32 %v176, %v201
    %v226 = vmul.f32 %v179, %v201
    %v227 = vmul.f32 %v182, %v201
    %v228 = vmul.f32 %v185, %v201
    %v229 = vmul.f32 %v188, %v201
    %v230 = vmul.f32 %v191, %v201
    %v231 = vmul.f32 %v194, %v201
    %v232 = vmul.f32 %v197, %v201
    %v233 = vmul.f32 %v200, %v201
    %v234 = vsub.f32 %v41, %v202
    %v235 = vsub.f32 %v42, %v202
    %v236 = vsub.f32 %v43, %v203
    %v237 = vsub.f32 %v44, %v203
    %v238 = vsub.f32 %v45, %v204
    %v239 = vsub.f32 %v46, %v204
    %v240 = vsub.f32 %v47, %v205
    %v241 = vsub.f32 %v48, %v205
    %v242 = vsub.f32 %v49, %v206
    %v243 = vsub.f32 %v50, %v206
    %v244 = vsub.f32 %v51, %v207
    %v245 = vsub.f32 %v52, %v207
    %v246 = vsub.f32 %v53, %v208
    %v247 = vsub.f32 %v54, %v208
    %v248 = vsub.f32 %v55, %v209
    %v249 = vsub.f32 %v56, %v209
    %v250 = vsub.f32 %v57, %v210
    %v251 = vsub.f32 %v58, %v210
    %v252 = vsub.f32 %v59, %v211
    %v253 = vsub.f32 %v60, %v211
    %v254 = vsub.f32 %v61, %v212
    %v255 = vsub.f32 %v62, %v212
    %v256 = vsub.f32 %v63, %v213
    %v257 = vsub.f32 %v64, %v213
    %v258 = vsub.f32 %v65, %v214
    %v259 = vsub.f32 %v66, %v214
    %v260 = vsub.f32 %v67, %v215
    %v261 = vsub.f32 %v68, %v215
    %v262 = vsub.f32 %v69, %v216
    %v263 = vsub.f32 %v70, %v216
    %v264 = vsub.f32 %v71, %v217
    %v265 = vsub.f32 %v72, %v217
    %v266 = vsub.f32 %v73, %v218
    %v267 = vsub.f32 %v74, %v218
    %v268 = vsub.f32 %v75, %v219
    %v269 = vsub.f32 %v76, %v219
    %v270 = vsub.f32 %v77, %v220
    %v271 = vsub.f32 %v78, %v220
    %v272 = vsub.f32 %v79, %v221
    %v273 = vsub.f32 %v80, %v221
    %v274 = vsub.f32 %v81, %v222
    %v275 = vsub.f32 %v82, %v222
    %v276 = vsub.f32 %v83, %v223
    %v277 = vsub.f32 %v84, %v223
    %v278 = vsub.f32 %v85, %v224
    %v279 = vsub.f32 %v86, %v224
    %v280 = vsub.f32 %v87, %v225
    %v281 = vsub.f32 %v88, %v225
    %v282 = vsub.f32 %v89, %v226
    %v283 = vsub.f32 %v90, %v226
    %v284 = vsub.f32 %v91, %v227
    %v285 = vsub.f32 %v92, %v227
    %v286 = vsub.f32 %v93, %v228
    %v287 = vsub.f32 %v94, %v228
    %v288 = vsub.f32 %v95, %v229
    %v289 = vsub.f32 %v96, %v229
    %v290 = vsub.f32 %v97, %v230
    %v291 = vsub.f32 %v98, %v230
    %v292 = vsub.f32 %v99, %v231
    %v293 = vsub.f32 %v100, %v231
    %v294 = vsub.f32 %v101, %v232
    %v295 = vsub.f32 %v102, %v232
    %v296 = vsub.f32 %v103, %v233
    %v297 = vsub.f32 %v104, %v233
    %v298 = vmul.f32 %v234, %v234
    %v299 = vmul.f32 %v235, %v235
    %v300 = vmul.f32 %v236, %v236
    %v301 = vmul.f32 %v237, %v237
    %v302 = vmul.f32 %v238, %v238
    %v303 = vmul.f32 %v239, %v239
    %v304 = vmul.f32 %v240, %v240
    %v305 = vmul.f32 %v241, %v241
    %v306 = vmul.f32 %v242, %v242
    %v307 = vmul.f32 %v243, %v243
    %v308 = vmul.f32 %v244, %v244
    %v309 = vmul.f32 %v245, %v245
    %v310 = vmul.f32 %v246, %v246
    %v311 = vmul.f32 %v247, %v247
    %v312 = vmul.f32 %v248, %v248
    %v313 = vmul.f32 %v249, %v249
    %v314 = vmul.f32 %v250, %v250
    %v315 = vmul.f32 %v251, %v251
    %v316 = vmul.f32 %v252, %v252
    %v317 = vmul.f32 %v253, %v253
    %v318 = vmul.f32 %v254, %v254
    %v319 = vmul.f32 %v255, %v255
    %v320 = vmul.f32 %v256, %v256
    %v321 = vmul.f32 %v257, %v257
    %v322 = vmul.f32 %v258, %v258
    %v323 = vmul.f32 %v259, %v259
    %v324 = vmul.f32 %v260, %v260
    %v325 = vmul.f32 %v261, %v261
    %v326 = vmul.f32 %v262, %v262
    %v327 = vmul.f32 %v263, %v263
    %v328 = vmul.f32 %v264, %v264
    %v329 = vmul.f32 %v265, %v265
    %v330 = vmul.f32 %v266, %v266
    %v331 = vmul.f32 %v267, %v267
    %v332 = vmul.f32 %v268, %v268
    %v333 = vmul.f32 %v269, %v269
    %v334 = vmul.f32 %v270, %v270
    %v335 = vmul.f32 %v271, %v271
    %v336 = vmul.f32 %v272, %v272
    %v337 = vmul.f32 %v273, %v273
    %v338 = vmul.f32 %v274, %v274
    %v339 = vmul.f32 %v275, %v275
    %v340 = vmul.f32 %v276, %v276
    %v341 = vmul.f32 %v277, %v277
    %v342 = vmul.f32 %v278, %v278
    %v343 = vmul.f32 %v279, %v279
    %v344 = vmul.f32 %v280, %v280
    %v345 = vmul.f32 %v281, %v281
    %v346 = vmul.f32 %v282, %v282
    %v347 = vmul.f32 %v283, %v283
    %v348 = vmul.f32 %v284, %v284
    %v349 = vmul.f32 %v285, %v285
    %v350 = vmul.f32 %v286, %v286
    %v351 = vmul.f32 %v287, %v287
    %v352 = vmul.f32 %v288, %v288
    %v353 = vmul.f32 %v289, %v289
    %v354 = vmul.f32 %v290, %v290
    %v355 = vmul.f32 %v291, %v291
    %v356 = vmul.f32 %v292, %v292
    %v357 = vmul.f32 %v293, %v293
    %v358 = vmul.f32 %v294, %v294
    %v359 = vmul.f32 %v295, %v295
    %v360 = vmul.f32 %v296, %v296
    %v361 = vmul.f32 %v297, %v297
    %v362 = vadd.f32 %v298, %v299
    %363 = vadd.xlane.f32.xlu0 %v362
    %v364 = vpop.xlane.xlu0 %363
    %v365 = vadd.f32 %v300, %v301
    %366 = vadd.xlane.f32.xlu0 %v365
    %v367 = vpop.xlane.xlu0 %366
    %v368 = vadd.f32 %v302, %v303
    %369 = vadd.xlane.f32.xlu0 %v368
    %v370 = vpop.xlane.xlu0 %369
    %v371 = vadd.f32 %v304, %v305
    %372 = vadd.xlane.f32.xlu0 %v371
    %v373 = vpop.xlane.xlu0 %372
    %v374 = vadd.f32 %v306, %v307
    %375 = vadd.xlane.f32.xlu0 %v374
    %v376 = vpop.xlane.xlu0 %375
    %v377 = vadd.f32 %v308, %v309
    %378 = vadd.xlane.f32.xlu0 %v377
    %v379 = vpop.xlane.xlu0 %378
    %v380 = vadd.f32 %v310, %v311
    %381 = vadd.xlane.f32.xlu0 %v380
    %v382 = vpop.xlane.xlu0 %381
    %v383 = vadd.f32 %v312, %v313
    %384 = vadd.xlane.f32.xlu0 %v383
    %v385 = vpop.xlane.xlu0 %384
    %v386 = vadd.f32 %v314, %v315
    %387 = vadd.xlane.f32.xlu0 %v386
    %v388 = vpop.xlane.xlu0 %387
    %v389 = vadd.f32 %v316, %v317
    %390 = vadd.xlane.f32.xlu0 %v389
    %v391 = vpop.xlane.xlu0 %390
    %v392 = vadd.f32 %v318, %v319
    %393 = vadd.xlane.f32.xlu0 %v392
    %v394 = vpop.xlane.xlu0 %393
    %v395 = vadd.f32 %v320, %v321
    %396 = vadd.xlane.f32.xlu0 %v395
    %v397 = vpop.xlane.xlu0 %396
    %v398 = vadd.f32 %v322, %v323
    %399 = vadd.xlane.f32.xlu0 %v398
    %v400 = vpop.xlane.xlu0 %399
    %v401 = vadd.f32 %v324, %v325
    %402 = vadd.xlane.f32.xlu0 %v401
    %v403 = vpop.xlane.xlu0 %402
    %v404 = vadd.f32 %v326, %v327
    %405 = vadd.xlane.f32.xlu0 %v404
    %v406 = vpop.xlane.xlu0 %405
    %v407 = vadd.f32 %v328, %v329
    %408 = vadd.xlane.f32.xlu0 %v407
    %v409 = vpop.xlane.xlu0 %408
    %v410 = vadd.f32 %v330, %v331
    %411 = vadd.xlane.f32.xlu0 %v410
    %v412 = vpop.xlane.xlu0 %411
    %v413 = vadd.f32 %v332, %v333
    %414 = vadd.xlane.f32.xlu0 %v413
    %v415 = vpop.xlane.xlu0 %414
    %v416 = vadd.f32 %v334, %v335
    %417 = vadd.xlane.f32.xlu0 %v416
    %v418 = vpop.xlane.xlu0 %417
    %v419 = vadd.f32 %v336, %v337
    %420 = vadd.xlane.f32.xlu0 %v419
    %v421 = vpop.xlane.xlu0 %420
    %v422 = vadd.f32 %v338, %v339
    %423 = vadd.xlane.f32.xlu0 %v422
    %v424 = vpop.xlane.xlu0 %423
    %v425 = vadd.f32 %v340, %v341
    %426 = vadd.xlane.f32.xlu0 %v425
    %v427 = vpop.xlane.xlu0 %426
    %v428 = vadd.f32 %v342, %v343
    %429 = vadd.xlane.f32.xlu0 %v428
    %v430 = vpop.xlane.xlu0 %429
    %v431 = vadd.f32 %v344, %v345
    %432 = vadd.xlane.f32.xlu0 %v431
    %v433 = vpop.xlane.xlu0 %432
    %v434 = vadd.f32 %v346, %v347
    %435 = vadd.xlane.f32.xlu0 %v434
    %v436 = vpop.xlane.xlu0 %435
    %v437 = vadd.f32 %v348, %v349
    %438 = vadd.xlane.f32.xlu0 %v437
    %v439 = vpop.xlane.xlu0 %438
    %v440 = vadd.f32 %v350, %v351
    %441 = vadd.xlane.f32.xlu0 %v440
    %v442 = vpop.xlane.xlu0 %441
    %v443 = vadd.f32 %v352, %v353
    %444 = vadd.xlane.f32.xlu0 %v443
    %v445 = vpop.xlane.xlu0 %444
    %v446 = vadd.f32 %v354, %v355
    %447 = vadd.xlane.f32.xlu0 %v446
    %v448 = vpop.xlane.xlu0 %447
    %v449 = vadd.f32 %v356, %v357
    %450 = vadd.xlane.f32.xlu0 %v449
    %v451 = vpop.xlane.xlu0 %450
    %v452 = vadd.f32 %v358, %v359
    %453 = vadd.xlane.f32.xlu0 %v452
    %v454 = vpop.xlane.xlu0 %453
    %v455 = vadd.f32 %v360, %v361
    %456 = vadd.xlane.f32.xlu0 %v455
    %v457 = vpop.xlane.xlu0 %456
    %v458 = vmul.f32 %v364, %v201
    %v459 = vmul.f32 %v367, %v201
    %v460 = vmul.f32 %v370, %v201
    %v461 = vmul.f32 %v373, %v201
    %v462 = vmul.f32 %v376, %v201
    %v463 = vmul.f32 %v379, %v201
    %v464 = vmul.f32 %v382, %v201
    %v465 = vmul.f32 %v385, %v201
    %v466 = vmul.f32 %v388, %v201
    %v467 = vmul.f32 %v391, %v201
    %v468 = vmul.f32 %v394, %v201
    %v469 = vmul.f32 %v397, %v201
    %v470 = vmul.f32 %v400, %v201
    %v471 = vmul.f32 %v403, %v201
    %v472 = vmul.f32 %v406, %v201
    %v473 = vmul.f32 %v409, %v201
    %v474 = vmul.f32 %v412, %v201
    %v475 = vmul.f32 %v415, %v201
    %v476 = vmul.f32 %v418, %v201
    %v477 = vmul.f32 %v421, %v201
    %v478 = vmul.f32 %v424, %v201
    %v479 = vmul.f32 %v427, %v201
    %v480 = vmul.f32 %v430, %v201
    %v481 = vmul.f32 %v433, %v201
    %v482 = vmul.f32 %v436, %v201
    %v483 = vmul.f32 %v439, %v201
    %v484 = vmul.f32 %v442, %v201
    %v485 = vmul.f32 %v445, %v201
    %v486 = vmul.f32 %v448, %v201
    %v487 = vmul.f32 %v451, %v201
    %v488 = vmul.f32 %v454, %v201
    %v489 = vmul.f32 %v457, %v201
    %v490 = vadd.f32 %v458, 1e-12
    %v491 = vadd.f32 %v459, 1e-12
    %v492 = vadd.f32 %v460, 1e-12
    %v493 = vadd.f32 %v461, 1e-12
    %v494 = vadd.f32 %v462, 1e-12
    %v495 = vadd.f32 %v463, 1e-12
    %v496 = vadd.f32 %v464, 1e-12
    %v497 = vadd.f32 %v465, 1e-12
    %v498 = vadd.f32 %v466, 1e-12
    %v499 = vadd.f32 %v467, 1e-12
    %v500 = vadd.f32 %v468, 1e-12
    %v501 = vadd.f32 %v469, 1e-12
    %v502 = vadd.f32 %v470, 1e-12
    %v503 = vadd.f32 %v471, 1e-12
    %v504 = vadd.f32 %v472, 1e-12
    %v505 = vadd.f32 %v473, 1e-12
    %v506 = vadd.f32 %v474, 1e-12
    %v507 = vadd.f32 %v475, 1e-12
    %v508 = vadd.f32 %v476, 1e-12
    %v509 = vadd.f32 %v477, 1e-12
    %v510 = vadd.f32 %v478, 1e-12
    %v511 = vadd.f32 %v479, 1e-12
    %v512 = vadd.f32 %v480, 1e-12
    %v513 = vadd.f32 %v481, 1e-12
    %v514 = vadd.f32 %v482, 1e-12
    %v515 = vadd.f32 %v483, 1e-12
    %v516 = vadd.f32 %v484, 1e-12
    %v517 = vadd.f32 %v485, 1e-12
    %v518 = vadd.f32 %v486, 1e-12
    %v519 = vadd.f32 %v487, 1e-12
    %v520 = vadd.f32 %v488, 1e-12
    %v521 = vadd.f32 %v489, 1e-12
    %v522 = vrsqrt.pop %v490
    %v523 = vrsqrt.pop %v491
    %v524 = vrsqrt.pop %v492
    %v525 = vrsqrt.pop %v493
    %v526 = vrsqrt.pop %v494
    %v527 = vrsqrt.pop %v495
    %v528 = vrsqrt.pop %v496
    %v529 = vrsqrt.pop %v497
    %v530 = vrsqrt.pop %v498
    %v531 = vrsqrt.pop %v499
    %v532 = vrsqrt.pop %v500
    %v533 = vrsqrt.pop %v501
    %v534 = vrsqrt.pop %v502
    %v535 = vrsqrt.pop %v503
    %v536 = vrsqrt.pop %v504
    %v537 = vrsqrt.pop %v505
    %v538 = vrsqrt.pop %v506
    %v539 = vrsqrt.pop %v507
    %v540 = vrsqrt.pop %v508
    %v541 = vrsqrt.pop %v509
    %v542 = vrsqrt.pop %v510
    %v543 = vrsqrt.pop %v511
    %v544 = vrsqrt.pop %v512
    %v545 = vrsqrt.pop %v513
    %v546 = vrsqrt.pop %v514
    %v547 = vrsqrt.pop %v515
    %v548 = vrsqrt.pop %v516
    %v549 = vrsqrt.pop %v517
    %v550 = vrsqrt.pop %v518
    %v551 = vrsqrt.pop %v519
    %v552 = vrsqrt.pop %v520
    %v553 = vrsqrt.pop %v521
    %v554 = vmul.f32 %v234, %v522
    %v555 = vmul.f32 %v235, %v522
    %v556 = vmul.f32 %v236, %v523
    %v557 = vmul.f32 %v237, %v523
    %v558 = vmul.f32 %v238, %v524
    %v559 = vmul.f32 %v239, %v524
    %v560 = vmul.f32 %v240, %v525
    %v561 = vmul.f32 %v241, %v525
    %v562 = vmul.f32 %v242, %v526
    %v563 = vmul.f32 %v243, %v526
    %v564 = vmul.f32 %v244, %v527
    %v565 = vmul.f32 %v245, %v527
    %v566 = vmul.f32 %v246, %v528
    %v567 = vmul.f32 %v247, %v528
    %v568 = vmul.f32 %v248, %v529
    %v569 = vmul.f32 %v249, %v529
    %v570 = vmul.f32 %v250, %v530
    %v571 = vmul.f32 %v251, %v530
    %v572 = vmul.f32 %v252, %v531
    %v573 = vmul.f32 %v253, %v531
    %v574 = vmul.f32 %v254, %v532
    %v575 = vmul.f32 %v255, %v532
    %v576 = vmul.f32 %v256, %v533
    %v577 = vmul.f32 %v257, %v533
    %v578 = vmul.f32 %v258, %v534
    %v579 = vmul.f32 %v259, %v534
    %v580 = vmul.f32 %v260, %v535
    %v581 = vmul.f32 %v261, %v535
    %v582 = vmul.f32 %v262, %v536
    %v583 = vmul.f32 %v263, %v536
    %v584 = vmul.f32 %v264, %v537
    %v585 = vmul.f32 %v265, %v537
    %v586 = vmul.f32 %v266, %v538
    %v587 = vmul.f32 %v267, %v538
    %v588 = vmul.f32 %v268, %v539
    %v589 = vmul.f32 %v269, %v539
    %v590 = vmul.f32 %v270, %v540
    %v591 = vmul.f32 %v271, %v540
    %v592 = vmul.f32 %v272, %v541
    %v593 = vmul.f32 %v273, %v541
    %v594 = vmul.f32 %v274, %v542
    %v595 = vmul.f32 %v275, %v542
    %v596 = vmul.f32 %v276, %v543
    %v597 = vmul.f32 %v277, %v543
    %v598 = vmul.f32 %v278, %v544
    %v599 = vmul.f32 %v279, %v544
    %v600 = vmul.f32 %v280, %v545
    %v601 = vmul.f32 %v281, %v545
    %v602 = vmul.f32 %v282, %v546
    %v603 = vmul.f32 %v283, %v546
    %v604 = vmul.f32 %v284, %v547
    %v605 = vmul.f32 %v285, %v547
    %v606 = vmul.f32 %v286, %v548
    %v607 = vmul.f32 %v287, %v548
    %v608 = vmul.f32 %v288, %v549
    %v609 = vmul.f32 %v289, %v549
    %v610 = vmul.f32 %v290, %v550
    %v611 = vmul.f32 %v291, %v550
    %v612 = vmul.f32 %v292, %v551
    %v613 = vmul.f32 %v293, %v551
    %v614 = vmul.f32 %v294, %v552
    %v615 = vmul.f32 %v295, %v552
    %v616 = vmul.f32 %v296, %v553
    %v617 = vmul.f32 %v297, %v553
    %v618 = vld [vmem:[#allocation5] sm:$0x3]
    %v620 = vlaneseq
    %v621 = vshrl.u32 %v620, 7
    %v622 = vsub.s32 0, %v621
    %v623 = vrot.slane %v618, %v622
    %v624 = vlaneseq
    %v625 = vshrl.u32 %v624, 7
    %v626 = vsub.s32 1, %v625
    %v627 = vrot.slane %v618, %v626
    %v630 = vmul.f32 %v554, %v623
    %v631 = vmul.f32 %v555, %v627
    %v632 = vmul.f32 %v556, %v623
    %v633 = vmul.f32 %v557, %v627
    %v634 = vmul.f32 %v558, %v623
    %v635 = vmul.f32 %v559, %v627
    %v636 = vmul.f32 %v560, %v623
    %v637 = vmul.f32 %v561, %v627
    %v638 = vmul.f32 %v562, %v623
    %v639 = vmul.f32 %v563, %v627
    %v640 = vmul.f32 %v564, %v623
    %v641 = vmul.f32 %v565, %v627
    %v642 = vmul.f32 %v566, %v623
    %v643 = vmul.f32 %v567, %v627
    %v644 = vmul.f32 %v568, %v623
    %v645 = vmul.f32 %v569, %v627
    %v646 = vmul.f32 %v570, %v623
    %v647 = vmul.f32 %v571, %v627
    %v648 = vmul.f32 %v572, %v623
    %v649 = vmul.f32 %v573, %v627
    %v650 = vmul.f32 %v574, %v623
    %v651 = vmul.f32 %v575, %v627
    %v652 = vmul.f32 %v576, %v623
    %v653 = vmul.f32 %v577, %v627
    %v654 = vmul.f32 %v578, %v623
    %v655 = vmul.f32 %v579, %v627
    %v656 = vmul.f32 %v580, %v623
    %v657 = vmul.f32 %v581, %v627
    %v658 = vmul.f32 %v582, %v623
    %v659 = vmul.f32 %v583, %v627
    %v660 = vmul.f32 %v584, %v623
    %v661 = vmul.f32 %v585, %v627
    %v662 = vmul.f32 %v586, %v623
    %v663 = vmul.f32 %v587, %v627
    %v664 = vmul.f32 %v588, %v623
    %v665 = vmul.f32 %v589, %v627
    %v666 = vmul.f32 %v590, %v623
    %v667 = vmul.f32 %v591, %v627
    %v668 = vmul.f32 %v592, %v623
    %v669 = vmul.f32 %v593, %v627
    %v670 = vmul.f32 %v594, %v623
    %v671 = vmul.f32 %v595, %v627
    %v672 = vmul.f32 %v596, %v623
    %v673 = vmul.f32 %v597, %v627
    %v674 = vmul.f32 %v598, %v623
    %v675 = vmul.f32 %v599, %v627
    %v676 = vmul.f32 %v600, %v623
    %v677 = vmul.f32 %v601, %v627
    %v678 = vmul.f32 %v602, %v623
    %v679 = vmul.f32 %v603, %v627
    %v680 = vmul.f32 %v604, %v623
    %v681 = vmul.f32 %v605, %v627
    %v682 = vmul.f32 %v606, %v623
    %v683 = vmul.f32 %v607, %v627
    %v684 = vmul.f32 %v608, %v623
    %v685 = vmul.f32 %v609, %v627
    %v686 = vmul.f32 %v610, %v623
    %v687 = vmul.f32 %v611, %v627
    %v688 = vmul.f32 %v612, %v623
    %v689 = vmul.f32 %v613, %v627
    %v690 = vmul.f32 %v614, %v623
    %v691 = vmul.f32 %v615, %v627
    %v692 = vmul.f32 %v616, %v623
    %v693 = vmul.f32 %v617, %v627
    %v694 = vld [vmem:[%s2] sm:$0x3]
    %v696 = vlaneseq
    %v697 = vshrl.u32 %v696, 7
    %v698 = vsub.s32 0, %v697
    %v699 = vrot.slane %v694, %v698
    %v700 = vlaneseq
    %v701 = vshrl.u32 %v700, 7
    %v702 = vsub.s32 1, %v701
    %v703 = vrot.slane %v694, %v702
    %v706 = vadd.f32 %v630, %v699
    %v707 = vadd.f32 %v631, %v703
    %v708 = vadd.f32 %v632, %v699
    %v709 = vadd.f32 %v633, %v703
    %v710 = vadd.f32 %v634, %v699
    %v711 = vadd.f32 %v635, %v703
    %v712 = vadd.f32 %v636, %v699
    %v713 = vadd.f32 %v637, %v703
    %v714 = vadd.f32 %v638, %v699
    %v715 = vadd.f32 %v639, %v703
    %v716 = vadd.f32 %v640, %v699
    %v717 = vadd.f32 %v641, %v703
    %v718 = vadd.f32 %v642, %v699
    %v719 = vadd.f32 %v643, %v703
    %v720 = vadd.f32 %v644, %v699
    %v721 = vadd.f32 %v645, %v703
    %v722 = vadd.f32 %v646, %v699
    %v723 = vadd.f32 %v647, %v703
    %v724 = vadd.f32 %v648, %v699
    %v725 = vadd.f32 %v649, %v703
    %v726 = vadd.f32 %v650, %v699
    %v727 = vadd.f32 %v651, %v703
    %v728 = vadd.f32 %v652, %v699
    %v729 = vadd.f32 %v653, %v703
    %v730 = vadd.f32 %v654, %v699
    %v731 = vadd.f32 %v655, %v703
    %v732 = vadd.f32 %v656, %v699
    %v733 = vadd.f32 %v657, %v703
    %v734 = vadd.f32 %v658, %v699
    %v735 = vadd.f32 %v659, %v703
    %v736 = vadd.f32 %v660, %v699
    %v737 = vadd.f32 %v661, %v703
    %v738 = vadd.f32 %v662, %v699
    %v739 = vadd.f32 %v663, %v703
    %v740 = vadd.f32 %v664, %v699
    %v741 = vadd.f32 %v665, %v703
    %v742 = vadd.f32 %v666, %v699
    %v743 = vadd.f32 %v667, %v703
    %v744 = vadd.f32 %v668, %v699
    %v745 = vadd.f32 %v669, %v703
    %v746 = vadd.f32 %v670, %v699
    %v747 = vadd.f32 %v671, %v703
    %v748 = vadd.f32 %v672, %v699
    %v749 = vadd.f32 %v673, %v703
    %v750 = vadd.f32 %v674, %v699
    %v751 = vadd.f32 %v675, %v703
    %v752 = vadd.f32 %v676, %v699
    %v753 = vadd.f32 %v677, %v703
    %v754 = vadd.f32 %v678, %v699
    %v755 = vadd.f32 %v679, %v703
    %v756 = vadd.f32 %v680, %v699
    %v757 = vadd.f32 %v681, %v703
    %v758 = vadd.f32 %v682, %v699
    %v759 = vadd.f32 %v683, %v703
    %v760 = vadd.f32 %v684, %v699
    %v761 = vadd.f32 %v685, %v703
    %v762 = vadd.f32 %v686, %v699
    %v763 = vadd.f32 %v687, %v703
    %v764 = vadd.f32 %v688, %v699
    %v765 = vadd.f32 %v689, %v703
    %v766 = vadd.f32 %v690, %v699
    %v767 = vadd.f32 %v691, %v703
    %v768 = vadd.f32 %v692, %v699
    %v769 = vadd.f32 %v693, %v703
    %v770 = vpack.c.bf16 %v708, %v706
    %v771 = vpack.c.bf16 %v709, %v707
    %v772 = vpack.c.bf16 %v712, %v710
    %v773 = vpack.c.bf16 %v713, %v711
    %v774 = vpack.c.bf16 %v716, %v714
    %v775 = vpack.c.bf16 %v717, %v715
    %v776 = vpack.c.bf16 %v720, %v718
    %v777 = vpack.c.bf16 %v721, %v719
    %v778 = vpack.c.bf16 %v724, %v722
    %v779 = vpack.c.bf16 %v725, %v723
    %v780 = vpack.c.bf16 %v728, %v726
    %v781 = vpack.c.bf16 %v729, %v727
    %v782 = vpack.c.bf16 %v732, %v730
    %v783 = vpack.c.bf16 %v733, %v731
    %v784 = vpack.c.bf16 %v736, %v734
    %v785 = vpack.c.bf16 %v737, %v735
    %v786 = vpack.c.bf16 %v740, %v738
    %v787 = vpack.c.bf16 %v741, %v739
    %v788 = vpack.c.bf16 %v744, %v742
    %v789 = vpack.c.bf16 %v745, %v743
    %v790 = vpack.c.bf16 %v748, %v746
    %v791 = vpack.c.bf16 %v749, %v747
    %v792 = vpack.c.bf16 %v752, %v750
    %v793 = vpack.c.bf16 %v753, %v751
    %v794 = vpack.c.bf16 %v756, %v754
    %v795 = vpack.c.bf16 %v757, %v755
    %v796 = vpack.c.bf16 %v760, %v758
    %v797 = vpack.c.bf16 %v761, %v759
    %v798 = vpack.c.bf16 %v764, %v762
    %v799 = vpack.c.bf16 %v765, %v763
    %v800 = vpack.c.bf16 %v768, %v766
    %v801 = vpack.c.bf16 %v769, %v767
    %v834 = vunpack.c.l.b16 %v770
    %v835 = vunpack.c.l.b16 %v771
    %v836 = vunpack.c.h.b16 %v770
    %v837 = vunpack.c.h.b16 %v771
    %v838 = vunpack.c.l.b16 %v772
    %v839 = vunpack.c.l.b16 %v773
    %v840 = vunpack.c.h.b16 %v772
    %v841 = vunpack.c.h.b16 %v773
    %v842 = vunpack.c.l.b16 %v774
    %v843 = vunpack.c.l.b16 %v775
    %v844 = vunpack.c.h.b16 %v774
    %v845 = vunpack.c.h.b16 %v775
    %v846 = vunpack.c.l.b16 %v776
    %v847 = vunpack.c.l.b16 %v777
    %v848 = vunpack.c.h.b16 %v776
    %v849 = vunpack.c.h.b16 %v777
    %v850 = vunpack.c.l.b16 %v778
    %v851 = vunpack.c.l.b16 %v779
    %v852 = vunpack.c.h.b16 %v778
    %v853 = vunpack.c.h.b16 %v779
    %v854 = vunpack.c.l.b16 %v780
    %v855 = vunpack.c.l.b16 %v781
    %v856 = vunpack.c.h.b16 %v780
    %v857 = vunpack.c.h.b16 %v781
    %v858 = vunpack.c.l.b16 %v782
    %v859 = vunpack.c.l.b16 %v783
    %v860 = vunpack.c.h.b16 %v782
    %v861 = vunpack.c.h.b16 %v783
    %v862 = vunpack.c.l.b16 %v784
    %v863 = vunpack.c.l.b16 %v785
    %v864 = vunpack.c.h.b16 %v784
    %v865 = vunpack.c.h.b16 %v785
    %v866 = vunpack.c.l.b16 %v786
    %v867 = vunpack.c.l.b16 %v787
    %v868 = vunpack.c.h.b16 %v786
    %v869 = vunpack.c.h.b16 %v787
    %v870 = vunpack.c.l.b16 %v788
    %v871 = vunpack.c.l.b16 %v789
    %v872 = vunpack.c.h.b16 %v788
    %v873 = vunpack.c.h.b16 %v789
    %v874 = vunpack.c.l.b16 %v790
    %v875 = vunpack.c.l.b16 %v791
    %v876 = vunpack.c.h.b16 %v790
    %v877 = vunpack.c.h.b16 %v791
    %v878 = vunpack.c.l.b16 %v792
    %v879 = vunpack.c.l.b16 %v793
    %v880 = vunpack.c.h.b16 %v792
    %v881 = vunpack.c.h.b16 %v793
    %v882 = vunpack.c.l.b16 %v794
    %v883 = vunpack.c.l.b16 %v795
    %v884 = vunpack.c.h.b16 %v794
    %v885 = vunpack.c.h.b16 %v795
    %v886 = vunpack.c.l.b16 %v796
    %v887 = vunpack.c.l.b16 %v797
    %v888 = vunpack.c.h.b16 %v796
    %v889 = vunpack.c.h.b16 %v797
    %v890 = vunpack.c.l.b16 %v798
    %v891 = vunpack.c.l.b16 %v799
    %v892 = vunpack.c.h.b16 %v798
    %v893 = vunpack.c.h.b16 %v799
    %v894 = vunpack.c.l.b16 %v800
    %v895 = vunpack.c.l.b16 %v801
    %v896 = vunpack.c.h.b16 %v800
    %v897 = vunpack.c.h.b16 %v801
    %v898 = vpack.c.b16 %v835, %v834
    %v899 = vpack.c.b16 %v837, %v836
    %v900 = vpack.c.b16 %v839, %v838
    %v901 = vpack.c.b16 %v841, %v840
    %v902 = vpack.c.b16 %v843, %v842
    %v903 = vpack.c.b16 %v845, %v844
    %v904 = vpack.c.b16 %v847, %v846
    %v905 = vpack.c.b16 %v849, %v848
    %v906 = vpack.c.b16 %v851, %v850
    %v907 = vpack.c.b16 %v853, %v852
    %v908 = vpack.c.b16 %v855, %v854
    %v909 = vpack.c.b16 %v857, %v856
    %v910 = vpack.c.b16 %v859, %v858
    %v911 = vpack.c.b16 %v861, %v860
    %v912 = vpack.c.b16 %v863, %v862
    %v913 = vpack.c.b16 %v865, %v864
    %v914 = vpack.c.b16 %v867, %v866
    %v915 = vpack.c.b16 %v869, %v868
    %v916 = vpack.c.b16 %v871, %v870
    %v917 = vpack.c.b16 %v873, %v872
    %v918 = vpack.c.b16 %v875, %v874
    %v919 = vpack.c.b16 %v877, %v876
    %v920 = vpack.c.b16 %v879, %v878
    %v921 = vpack.c.b16 %v881, %v880
    %v922 = vpack.c.b16 %v883, %v882
    %v923 = vpack.c.b16 %v885, %v884
    %v924 = vpack.c.b16 %v887, %v886
    %v925 = vpack.c.b16 %v889, %v888
    %v926 = vpack.c.b16 %v891, %v890
    %v927 = vpack.c.b16 %v893, %v892
    %v928 = vpack.c.b16 %v895, %v894
    %v929 = vpack.c.b16 %v897, %v896
    %962 = vst [vmem:[#allocation7] sm:$0xff] %v898
    %963 = vst [vmem:[#allocation7 + $0x8] sm:$0xff] %v899
    %964 = vst [vmem:[#allocation7 + $0x10] sm:$0xff] %v900
    %965 = vst [vmem:[#allocation7 + $0x18] sm:$0xff] %v901
    %966 = vst [vmem:[#allocation7 + $0x20] sm:$0xff] %v902
    %967 = vst [vmem:[#allocation7 + $0x28] sm:$0xff] %v903
    %968 = vst [vmem:[#allocation7 + $0x30] sm:$0xff] %v904
    %969 = vst [vmem:[#allocation7 + $0x38] sm:$0xff] %v905
    %970 = vst [vmem:[#allocation7 + $0x40] sm:$0xff] %v906
    %971 = vst [vmem:[#allocation7 + $0x48] sm:$0xff] %v907
    %972 = vst [vmem:[#allocation7 + $0x50] sm:$0xff] %v908
    %973 = vst [vmem:[#allocation7 + $0x58] sm:$0xff] %v909
    %974 = vst [vmem:[#allocation7 + $0x60] sm:$0xff] %v910
    %975 = vst [vmem:[#allocation7 + $0x68] sm:$0xff] %v911
    %976 = vst [vmem:[#allocation7 + $0x70] sm:$0xff] %v912
    %977 = vst [vmem:[#allocation7 + $0x78] sm:$0xff] %v913
    %978 = vst [vmem:[#allocation7 + $0x80] sm:$0xff] %v914
    %979 = vst [vmem:[#allocation7 + $0x88] sm:$0xff] %v915
    %980 = vst [vmem:[#allocation7 + $0x90] sm:$0xff] %v916
    %981 = vst [vmem:[#allocation7 + $0x98] sm:$0xff] %v917
    %982 = vst [vmem:[#allocation7 + $0xa0] sm:$0xff] %v918
    %983 = vst [vmem:[#allocation7 + $0xa8] sm:$0xff] %v919
    %984 = vst [vmem:[#allocation7 + $0xb0] sm:$0xff] %v920
    %985 = vst [vmem:[#allocation7 + $0xb8] sm:$0xff] %v921
    %986 = vst [vmem:[#allocation7 + $0xc0] sm:$0xff] %v922
    %987 = vst [vmem:[#allocation7 + $0xc8] sm:$0xff] %v923
    %988 = vst [vmem:[#allocation7 + $0xd0] sm:$0xff] %v924
    %989 = vst [vmem:[#allocation7 + $0xd8] sm:$0xff] %v925
    %990 = vst [vmem:[#allocation7 + $0xe0] sm:$0xff] %v926
    %991 = vst [vmem:[#allocation7 + $0xe8] sm:$0xff] %v927
    %992 = vst [vmem:[#allocation7 + $0xf0] sm:$0xff] %v928
    %993 = vst [vmem:[#allocation7 + $0xf8] sm:$0xff] %v929
    // Predicated region
    $region22: #{tpu_custom_call.1} parent=1 // pred_check
      _
    $region23: #{tpu_custom_call.1} parent=1 // pred_check_branch
      %995 = sbr.rel (0) target = $region25
    $region24: #{tpu_custom_call.1} parent=1 // pred_region
      %s997 = ssub.s32 4096, 4096
      %998 = vsyncadd [#allocation4], %s997
      %s999 = sshll.u32 [#allocation7], 4
      %s1000 = int_to_ptr.vmem [resolvable:$true] %s999
      %1005 = dma.vmem_to_hbm [thread:$0]  %s1000, 4096, %s3, [#allocation4], 128, 128, 8
    $region25: #{tpu_custom_call.1} parent=1 // pred_fallthru
      _
    // Predicated region
    $region26: #{tpu_custom_call.1} parent=1 // pred_check
      _
    $region27: #{tpu_custom_call.1} parent=1 // pred_check_branch
      %1007 = sbr.rel (0) target = $region29
    $region28: #{tpu_custom_call.1} parent=1 // pred_region
      %1008 = dma.done [#allocation4], 4096
    $region29: #{tpu_custom_call.1} parent=1 // pred_fallthru
      _
    %1009 = vsyncpa [#allocation3], 1
    %1010 = vsyncpa [#allocation6], 1
    %1011 = vsyncpa [#allocation4], 1

</llo_original>
